<compile_context>
chip_gen: v7x
topology: tpu7x:2x2x1
jax: 0.10.0
libtpu: 0.0.40
codegen_flags: <defaults>
</compile_context>

<pallas_src>
import jax
import jax.numpy as jnp
from jax.experimental import pallas as pl
from jax.experimental.pallas import tpu as pltpu


def _round_up(x, m):
    return ((x + m - 1) // m) * m


def adapter_kernel(x_ref, w1_ref, b1_ref, w2_ref, b2_ref, o_ref):
    # One grid step processes a (tm, in_size) tile of rows. Weights / biases
    # are VMEM-resident (constant index_map) for every step.
    x = x_ref[...]                                             # (tm, in) f32
    # bf16 MXU inputs, f32 accumulation.
    h = jnp.dot(x.astype(jnp.bfloat16), w1_ref[...],
                preferred_element_type=jnp.float32)            # (tm, hidden)
    h = h + b1_ref[...]
    h = jnp.maximum(h, 0.0)                                    # ReLU in f32 (VPU)
    y = jnp.dot(h.astype(jnp.bfloat16), w2_ref[...],
                preferred_element_type=jnp.float32)            # (tm, in)
    y = y + b2_ref[...]
    o_ref[...] = (y + x).astype(o_ref.dtype)                   # residual in f32


def adapter_forward(x, w1, b1, w2, b2, *, tm=2048):
    """x: [..., in]; w1: [in, hidden]; b1: [hidden]; w2: [hidden, in]; b2: [in]."""
    orig_shape = x.shape
    in_size = orig_shape[-1]
    hidden = w1.shape[1]
    x2d = x.reshape(-1, in_size)
    M = x2d.shape[0]

    # Row-tile selection: large tiles amortize the ~0.35us per-step overhead.
    # Clamp to the (8-aligned) row count so tiny problems stay single-step, then
    # pad M up to a multiple of the tile instead of asserting divisibility.
    # VMEM use (x + out, double-buffered) = 4 * tm * in_size * 4B; at the default
    # tm=2048 and in=32 that is ~1 MiB -> safe under the 16/32/32 MiB scoped-VMEM
    # defaults of v5e/v6e/v7x.
    tm_eff = min(_round_up(tm, 8), _round_up(M, 8))
    M_pad = _round_up(M, tm_eff)
    if M_pad != M:
        x2d = jnp.pad(x2d, ((0, M_pad - M), (0, 0)))

    # Weights cast once to bf16 (MXU-native on v5e/v6e/v7x); biases stay f32.
    w1_bf = w1.astype(jnp.bfloat16)
    w2_bf = w2.astype(jnp.bfloat16)
    b1_2d = b1.reshape(1, hidden).astype(jnp.float32)
    b2_2d = b2.reshape(1, in_size).astype(jnp.float32)

    grid = (M_pad // tm_eff,)
    out = pl.pallas_call(
        adapter_kernel,
        out_shape=jax.ShapeDtypeStruct((M_pad, in_size), x.dtype),
        grid_spec=pltpu.PrefetchScalarGridSpec(
            num_scalar_prefetch=0,
            grid=grid,
            in_specs=[
                pl.BlockSpec((tm_eff, in_size), lambda i: (i, 0)),     # x rows
                pl.BlockSpec((in_size, hidden), lambda i: (0, 0)),     # W1 (resident)
                pl.BlockSpec((1, hidden), lambda i: (0, 0)),           # b1 (resident)
                pl.BlockSpec((hidden, in_size), lambda i: (0, 0)),     # W2 (resident)
                pl.BlockSpec((1, in_size), lambda i: (0, 0)),          # b2 (resident)
            ],
            out_specs=pl.BlockSpec((tm_eff, in_size), lambda i: (i, 0)),
        ),
        compiler_params=pltpu.CompilerParams(
            dimension_semantics=("parallel",)),   # rows shard across TCs on v7x
    )(x2d, w1_bf, b1_2d, w2_bf, b2_2d)

    if M_pad != M:
        out = out[:M]
    return out.reshape(orig_shape)


if __name__ == "__main__":
    key = jax.random.PRNGKey(0)
    k_x, k_w1, k_b1, k_w2, k_b2 = jax.random.split(key, 5)

    # Small shapes consistent with the module: in_size=32, hidden_size=16,
    # input x of shape [batch=2, seq=8, in_size=32].
    in_size, hidden_size = 32, 16
    batch, seq = 2, 8

    x = jax.random.normal(k_x, (batch, seq, in_size), dtype=jnp.float32)

    # Deterministic parameter init (PyTorch nn.Linear-like uniform scale).
    lim1 = 1.0 / (in_size ** 0.5)
    lim2 = 1.0 / (hidden_size ** 0.5)
    # stored pre-transposed: fc1.weight is [hidden, in] in PyTorch -> w1 = [in, hidden]
    w1 = jax.random.uniform(k_w1, (in_size, hidden_size), jnp.float32, -lim1, lim1)
    b1 = jax.random.uniform(k_b1, (hidden_size,), jnp.float32, -lim1, lim1)
    w2 = jax.random.uniform(k_w2, (hidden_size, in_size), jnp.float32, -lim2, lim2)
    b2 = jax.random.uniform(k_b2, (in_size,), jnp.float32, -lim2, lim2)

    out = adapter_forward(x, w1, b1, w2, b2)
    jax.block_until_ready(out)

    assert out.shape == x.shape and out.dtype == x.dtype

    # Reference matching the kernel's bf16-MXU / f32-accumulate recipe.
    h_ref = jnp.maximum(
        jnp.dot(x.astype(jnp.bfloat16), w1.astype(jnp.bfloat16),
                preferred_element_type=jnp.float32) + b1, 0.0)
    ref_bf = jnp.dot(h_ref.astype(jnp.bfloat16), w2.astype(jnp.bfloat16),
                     preferred_element_type=jnp.float32) + b2 + x
    assert jnp.allclose(out, ref_bf, atol=1e-3, rtol=1e-3), "mismatch vs bf16 reference"

    # Looser sanity check against the pure-f32 math of the original module.
    ref_f32 = jnp.maximum(x @ w1 + b1, 0.0) @ w2 + b2 + x
    assert jnp.allclose(out, ref_f32, atol=5e-2, rtol=5e-2), "mismatch vs f32 reference"

    print("KERNEL_OK")
</pallas_src>

<mosaic_0001>
module attributes {stable_mosaic.version = 11 : i64} {
  func.func @adapter_kernel(%arg0: i32, %arg1: memref<16x32xf32, #tpu.memory_space<vmem>>, %arg2: memref<32x16xbf16, #tpu.memory_space<vmem>>, %arg3: memref<1x16xf32, #tpu.memory_space<vmem>>, %arg4: memref<16x32xbf16, #tpu.memory_space<vmem>>, %arg5: memref<1x32xf32, #tpu.memory_space<vmem>>, %arg6: memref<16x32xf32, #tpu.memory_space<vmem>>) attributes {dimension_semantics = [#tpu.dimension_semantics<parallel>], iteration_bounds = array<i64: 1>, scalar_prefetch = 0 : i64, scratch_operands = 0 : i64, tpu.core_type = #tpu.core_type<tc>, window_params = [{transform_indices = @transform_0, window_bounds = array<i64: 16, 32>}, {pipeline_mode = #tpu.pipeline_mode<synchronous>, transform_indices = @transform_1, window_bounds = array<i64: 32, 16>}, {pipeline_mode = #tpu.pipeline_mode<synchronous>, transform_indices = @transform_2, window_bounds = array<i64: 1, 16>}, {pipeline_mode = #tpu.pipeline_mode<synchronous>, transform_indices = @transform_3, window_bounds = array<i64: 16, 32>}, {pipeline_mode = #tpu.pipeline_mode<synchronous>, transform_indices = @transform_4, window_bounds = array<i64: 1, 32>}, {transform_indices = @transform_5, window_bounds = array<i64: 16, 32>}]} {
    %c0 = arith.constant 0 : index
    %c0_0 = arith.constant 0 : index
    %0 = vector.load %arg1[%c0, %c0_0] : memref<16x32xf32, #tpu.memory_space<vmem>>, vector<16x32xf32>
    %1 = arith.truncf %0 : vector<16x32xf32> to vector<16x32xbf16>
    %c0_1 = arith.constant 0 : index
    %c0_2 = arith.constant 0 : index
    %2 = vector.load %arg2[%c0_1, %c0_2] : memref<32x16xbf16, #tpu.memory_space<vmem>>, vector<32x16xbf16>
    %cst = arith.constant dense<0.000000e+00> : vector<16x16xf32>
    %3 = tpu.matmul %1, %2, %cst {dimension_numbers = #tpu.dot_dimension_numbers<[1], [0], [0], [1], [0, 0, 1, 1], [], []>} : vector<16x32xbf16>, vector<32x16xbf16>, vector<16x16xf32> -> vector<16x16xf32>
    %c0_3 = arith.constant 0 : index
    %c0_4 = arith.constant 0 : index
    %4 = vector.load %arg3[%c0_3, %c0_4] : memref<1x16xf32, #tpu.memory_space<vmem>>, vector<1x16xf32>
    %5 = vector.broadcast %4 : vector<1x16xf32> to vector<16x16xf32>
    %6 = arith.addf %3, %5 : vector<16x16xf32>
    %cst_5 = arith.constant 0.000000e+00 : f32
    %7 = vector.broadcast %cst_5 : f32 to vector<16x16xf32>
    %8 = arith.maximumf %6, %7 : vector<16x16xf32>
    %9 = arith.truncf %8 : vector<16x16xf32> to vector<16x16xbf16>
    %c0_6 = arith.constant 0 : index
    %c0_7 = arith.constant 0 : index
    %10 = vector.load %arg4[%c0_6, %c0_7] : memref<16x32xbf16, #tpu.memory_space<vmem>>, vector<16x32xbf16>
    %cst_8 = arith.constant dense<0.000000e+00> : vector<16x32xf32>
    %11 = tpu.matmul %9, %10, %cst_8 {dimension_numbers = #tpu.dot_dimension_numbers<[1], [0], [0], [1], [0, 0, 1, 1], [], []>} : vector<16x16xbf16>, vector<16x32xbf16>, vector<16x32xf32> -> vector<16x32xf32>
    %c0_9 = arith.constant 0 : index
    %c0_10 = arith.constant 0 : index
    %12 = vector.load %arg5[%c0_9, %c0_10] : memref<1x32xf32, #tpu.memory_space<vmem>>, vector<1x32xf32>
    %13 = vector.broadcast %12 : vector<1x32xf32> to vector<16x32xf32>
    %14 = arith.addf %11, %13 : vector<16x32xf32>
    %15 = arith.addf %14, %0 : vector<16x32xf32>
    %c0_11 = arith.constant 0 : index
    %c0_12 = arith.constant 0 : index
    %16 = vector.load %arg6[%c0_11, %c0_12] : memref<16x32xf32, #tpu.memory_space<vmem>>, vector<16x32xf32>
    tpu.vector_store %arg6[%c0_11, %c0_12], %15 {strides = array<i32>} : memref<16x32xf32, #tpu.memory_space<vmem>>, vector<16x32xf32>,
    return
  }
  func.func @transform_0(%arg0: i32) -> (i32, i32) {
    %c0_i32 = arith.constant 0 : i32
    %c0_i32_0 = arith.constant 0 : i32
    return %arg0, %c0_i32 : i32, i32
  }
  func.func @transform_1(%arg0: i32) -> (i32, i32) {
    %c0_i32 = arith.constant 0 : i32
    %c0_i32_0 = arith.constant 0 : i32
    %c0_i32_1 = arith.constant 0 : i32
    return %c0_i32, %c0_i32_0 : i32, i32
  }
  func.func @transform_2(%arg0: i32) -> (i32, i32) {
    %c0_i32 = arith.constant 0 : i32
    %c0_i32_0 = arith.constant 0 : i32
    %c0_i32_1 = arith.constant 0 : i32
    return %c0_i32, %c0_i32_0 : i32, i32
  }
  func.func @transform_3(%arg0: i32) -> (i32, i32) {
    %c0_i32 = arith.constant 0 : i32
    %c0_i32_0 = arith.constant 0 : i32
    %c0_i32_1 = arith.constant 0 : i32
    return %c0_i32, %c0_i32_0 : i32, i32
  }
  func.func @transform_4(%arg0: i32) -> (i32, i32) {
    %c0_i32 = arith.constant 0 : i32
    %c0_i32_0 = arith.constant 0 : i32
    %c0_i32_1 = arith.constant 0 : i32
    return %c0_i32, %c0_i32_0 : i32, i32
  }
  func.func @transform_5(%arg0: i32) -> (i32, i32) {
    %c0_i32 = arith.constant 0 : i32
    %c0_i32_0 = arith.constant 0 : i32
    return %arg0, %c0_i32 : i32, i32
  }
}

</mosaic_0001>

<llo_original>
// kernel: tpu_custom_call.1
$region0: #{tpu_custom_call.1}
  #allocation0 [shape = 'u32[]', space=smem, size = 0x4, offset = 0x4, fixed_abs, tag = 'smem constant byte address 0x4 - core index']
  #allocation1 [shape = 'u32[144,128]{1,0:T(1,128)}', space=vmem, size = 0x12000, scoped, tag = 'internal scratch']
  %s0 = inlined_call_operand.vmem [shape: f32[16,32], index: 0, kind: input, shape index: {}]
  %s1 = inlined_call_operand.vmem [shape: bf16[32,16], index: 1, kind: input, shape index: {}]
  %s2 = inlined_call_operand.vmem [shape: f32[1,16], index: 2, kind: input, shape index: {}]
  %s3 = inlined_call_operand.vmem [shape: bf16[16,32], index: 3, kind: input, shape index: {}]
  %s4 = inlined_call_operand.vmem [shape: f32[1,32], index: 4, kind: input, shape index: {}]
  %s5 = inlined_call_operand.hbm [shape: f32[16,32], index: 5, kind: output, shape index: {}]
  %s6 = sld [smem:[#allocation0]]
  $region30: #{tpu_custom_call.1} parent=0
    _
  %s8 = ssub.s32 1, %s6
  %s9 = scalar_select 0, %s8, %s6
  $region1: #{tpu_custom_call.1} parent=0
    #allocation2 [shape = 'u8[8192]{0}', space=vmem, size = 0x2000, scoped, tag = 'output window, operand 0, single buffered']
    #allocation3 [shape = 's32[1]{0}', space=sflag, size = 0x4, scoped, tag = 'scoped memory for tpu_custom_call.1']
    %10 = vsyncpa [#allocation3], 0
    // Predicated region
    $region2: #{tpu_custom_call.1} parent=1 // pred_check
      _
    $region3: #{tpu_custom_call.1} parent=1 // pred_check_branch
      %12 = sbr.rel (0) target = $region5
    $region4: #{tpu_custom_call.1} parent=1 // pred_region
      _
    $region5: #{tpu_custom_call.1} parent=1 // pred_fallthru
      _
    // Predicated region
    $region6: #{tpu_custom_call.1} parent=1 // pred_check
      _
    $region7: #{tpu_custom_call.1} parent=1 // pred_check_branch
      %14 = sbr.rel (0) target = $region9
    $region8: #{tpu_custom_call.1} parent=1 // pred_region
      _
    $region9: #{tpu_custom_call.1} parent=1 // pred_fallthru
      _
    // Predicated region
    $region10: #{tpu_custom_call.1} parent=1 // pred_check
      _
    $region11: #{tpu_custom_call.1} parent=1 // pred_check_branch
      %16 = sbr.rel (0) target = $region13
    $region12: #{tpu_custom_call.1} parent=1 // pred_region
      _
    $region13: #{tpu_custom_call.1} parent=1 // pred_fallthru
      _
    // Predicated region
    $region14: #{tpu_custom_call.1} parent=1 // pred_check
      _
    $region15: #{tpu_custom_call.1} parent=1 // pred_check_branch
      %18 = sbr.rel (0) target = $region17
    $region16: #{tpu_custom_call.1} parent=1 // pred_region
      _
    $region17: #{tpu_custom_call.1} parent=1 // pred_fallthru
      _
    // Predicated region
    $region18: #{tpu_custom_call.1} parent=1 // pred_check
      _
    $region19: #{tpu_custom_call.1} parent=1 // pred_check_branch
      %20 = sbr.rel (0) target = $region21
    $region20: #{tpu_custom_call.1} parent=1 // pred_region
      _
    $region21: #{tpu_custom_call.1} parent=1 // pred_fallthru
      _
    %v22 = vld [vmem:[%s0] sm:$0xff]
    %v23 = vld [vmem:[%s0 + $0x8] sm:$0xff]
    %v24 = vpack.c.bf16 %v23, %v22
    %v25 = vld [vmem:[%s1] sm:$0xf]
    %v26 = vld [vmem:[%s1 + $0x4] sm:$0xf]
    %v27 = vld [vmem:[%s1 + $0x8] sm:$0xf]
    %v28 = vld [vmem:[%s1 + $0xc] sm:$0xf]
    %v29 = vld [vmem:[%s2] sm:$0x1]
    %v31 = vlaneseq
    %v32 = vshrl.u32 %v31, 7
    %v33 = vsub.s32 0, %v32
    %v34 = vrot.slane %v29, %v33
    %v40 = vunpack.c.l.b16 %v25
    %v41 = vunpack.c.l.b16 %v26
    %v42 = vunpack.c.l.b16 %v27
    %v43 = vunpack.c.l.b16 %v28
    %v44 = vpack.c.b16 %v41, %v40
    %v45 = vpack.c.b16 %v43, %v42
    %vm48 = vcmask 261120
    %v50 = vsel %vm48, %v24, 0
    %52 = vmatprep.subr.bf16.mxu0 0
    %53 = vmatpush1.bf16.msra.mxu0 %v44
    %54 = vmatprep.subr.bf16.mxu0 0
    %55 = vmatpush1.bf16.msra.mxu0 %v45
    %56 = vmatprep.subr.bf16.mxu0 0
    %57 = vmatpush1.bf16.msra.mxu0 0
    %58 = vmatprep.subr.bf16.mxu0 0
    %59 = vmatpush1.bf16.msra.mxu0 0
    %60 = vmatprep.subr.bf16.mxu0 0
    %61 = vmatpush1.bf16.msra.mxu0 0
    %62 = vmatprep.subr.bf16.mxu0 0
    %63 = vmatpush1.bf16.msra.mxu0 0
    %64 = vmatprep.subr.bf16.mxu0 0
    %65 = vmatpush1.bf16.msra.mxu0 0
    %66 = vmatprep.subr.bf16.mxu0 0
    %67 = vmatpush1.bf16.msra.mxu0 0
    %68 = vmatprep.subr.bf16.mxu0 0
    %69 = vmatpush1.bf16.msra.mxu0 0
    %70 = vmatprep.subr.bf16.mxu0 0
    %71 = vmatpush1.bf16.msra.mxu0 0
    %72 = vmatprep.subr.bf16.mxu0 0
    %73 = vmatpush1.bf16.msra.mxu0 0
    %74 = vmatprep.subr.bf16.mxu0 0
    %75 = vmatpush1.bf16.msra.mxu0 0
    %76 = vmatprep.subr.bf16.mxu0 0
    %77 = vmatpush1.bf16.msra.mxu0 0
    %78 = vmatprep.subr.bf16.mxu0 0
    %79 = vmatpush1.bf16.msra.mxu0 0
    %80 = vmatprep.subr.bf16.mxu0 0
    %81 = vmatpush1.bf16.msra.mxu0 0
    %82 = vmatprep.subr.bf16.mxu0 0
    %83 = vmatpush1.bf16.msra.mxu0 0
    %84 = vmatprep.mubr.bf16.mxu0 0
    %85 = vmatmul.mubr.bf16.gmra.mrb[0].mxu0 %v50
    %v86 = vpop.f32.mrb[0].mxu0
    %v87 = vadd.f32 %v34, %v86
    %v88 = vpop.f32.mrb[0].mxu0
    %v89 = vpop.f32.mrb[0].mxu0
    %v90 = vadd.f32 %v34, %v89
    %v91 = vpop.f32.mrb[0].mxu0
    %92 = vdwg.mxu0
    %v93 = vmax.f32 %v87, 0.0
    %v94 = vmax.f32 %v90, 0.0
    %v95 = vpack.c.bf16 %v94, %v93
    %v96 = vld [vmem:[%s3] sm:$0xf]
    %v97 = vld [vmem:[%s3 + $0x4] sm:$0xf]
    %v98 = vld [vmem:[%s4] sm:$0x1]
    %v100 = vlaneseq
    %v101 = vshrl.u32 %v100, 7
    %v102 = vsub.s32 0, %v101
    %v103 = vrot.slane %v98, %v102
    %v107 = vunpack.c.l.b16 %v96
    %v108 = vunpack.c.l.b16 %v97
    %v109 = vpack.c.b16 %v108, %v107
    %vm111 = vcmask 130048
    %v113 = vsel %vm111, %v95, 0
    %115 = vmatprep.subr.bf16.mxu0 0
    %116 = vmatpush1.bf16.msra.mxu0 %v109
    %117 = vmatprep.subr.bf16.mxu0 0
    %118 = vmatpush1.bf16.msra.mxu0 0
    %119 = vmatprep.subr.bf16.mxu0 0
    %120 = vmatpush1.bf16.msra.mxu0 0
    %121 = vmatprep.subr.bf16.mxu0 0
    %122 = vmatpush1.bf16.msra.mxu0 0
    %123 = vmatprep.subr.bf16.mxu0 0
    %124 = vmatpush1.bf16.msra.mxu0 0
    %125 = vmatprep.subr.bf16.mxu0 0
    %126 = vmatpush1.bf16.msra.mxu0 0
    %127 = vmatprep.subr.bf16.mxu0 0
    %128 = vmatpush1.bf16.msra.mxu0 0
    %129 = vmatprep.subr.bf16.mxu0 0
    %130 = vmatpush1.bf16.msra.mxu0 0
    %131 = vmatprep.subr.bf16.mxu0 0
    %132 = vmatpush1.bf16.msra.mxu0 0
    %133 = vmatprep.subr.bf16.mxu0 0
    %134 = vmatpush1.bf16.msra.mxu0 0
    %135 = vmatprep.subr.bf16.mxu0 0
    %136 = vmatpush1.bf16.msra.mxu0 0
    %137 = vmatprep.subr.bf16.mxu0 0
    %138 = vmatpush1.bf16.msra.mxu0 0
    %139 = vmatprep.subr.bf16.mxu0 0
    %140 = vmatpush1.bf16.msra.mxu0 0
    %141 = vmatprep.subr.bf16.mxu0 0
    %142 = vmatpush1.bf16.msra.mxu0 0
    %143 = vmatprep.subr.bf16.mxu0 0
    %144 = vmatpush1.bf16.msra.mxu0 0
    %145 = vmatprep.subr.bf16.mxu0 0
    %146 = vmatpush1.bf16.msra.mxu0 0
    %147 = vmatprep.mubr.bf16.mxu0 0
    %148 = vmatmul.mubr.bf16.gmra.mrb[0].mxu0 %v113
    %v149 = vpop.f32.mrb[0].mxu0
    %v150 = vadd.f32 %v103, %v149
    %v151 = vpop.f32.mrb[0].mxu0
    %v152 = vpop.f32.mrb[0].mxu0
    %v153 = vadd.f32 %v103, %v152
    %v154 = vpop.f32.mrb[0].mxu0
    %155 = vdwg.mxu0
    %v156 = vadd.f32 %v150, %v22
    %v157 = vadd.f32 %v153, %v23
    %158 = vst.msk [vmem:[#allocation2] sm:$0xff] %vm48, %v156
    %159 = vst.msk [vmem:[#allocation2 + $0x8] sm:$0xff] %vm48, %v157
    // Predicated region
    $region22: #{tpu_custom_call.1} parent=1 // pred_check
      _
    $region23: #{tpu_custom_call.1} parent=1 // pred_check_branch
      %161 = sbr.rel (0) target = $region25
    $region24: #{tpu_custom_call.1} parent=1 // pred_region
      %s163 = ssub.s32 256, 256
      %164 = vsyncadd [#allocation3], %s163
      %s165 = sshll.u32 [#allocation2], 4
      %s166 = int_to_ptr.vmem [resolvable:$true] %s165
      %171 = dma.vmem_to_hbm [thread:$0]  %s166, 256, %s5, [#allocation3], 128, 128, 8
    $region25: #{tpu_custom_call.1} parent=1 // pred_fallthru
      _
    // Predicated region
    $region26: #{tpu_custom_call.1} parent=1 // pred_check
      _
    $region27: #{tpu_custom_call.1} parent=1 // pred_check_branch
      %173 = sbr.rel (0) target = $region29
    $region28: #{tpu_custom_call.1} parent=1 // pred_region
      %174 = dma.done [#allocation3], 256
    $region29: #{tpu_custom_call.1} parent=1 // pred_fallthru
      _
    %175 = vsyncpa [#allocation3], 1

</llo_original>
